<compile_context>
chip_gen: v6e
topology: v6e:2x2x1
jax: 0.10.0
libtpu: 0.0.40
codegen_flags: <defaults>
</compile_context>

<pallas_src>
import jax
import jax.numpy as jnp
from jax import lax
from jax.experimental import pallas as pl
from jax.experimental.pallas import tpu as pltpu

_TD = 1024  # D-axis tile (multiple of 256 for unfragmented MXU passes)


def _make_gram_kernel(d, td, k_per, needs_mask):
    def kernel(m_ref, gram_ref):
        ki = pl.program_id(1)  # reduction (D) axis, marked "arbitrary"

        @pl.when(ki == 0)
        def _():
            gram_ref[...] = jnp.zeros_like(gram_ref)

        x = m_ref[...].astype(jnp.float32)

        if needs_mask:
            # Zero the garbage lanes of the ragged final D tile (no HBM pad;
            # out-of-bounds block contents are unspecified, so mask them).
            pi = pl.program_id(0)
            col0 = (pi * k_per + ki) * td
            col = lax.broadcasted_iota(jnp.int32, x.shape, 1) + col0
            x = jnp.where(col < d, x, 0.0)

        # (n, td) contracted with (n, td) over the lane axis -> (n, n).
        # Avoids materializing x.T; accumulates straight into the resident
        # output block (its index_map is constant along the reduction axis).
        acc = lax.dot_general(
            x, x,
            dimension_numbers=(((1,), (1,)), ((), ())),
            preferred_element_type=jnp.float32)
        gram_ref[...] += acc[None, :, :]

    return kernel


def _gram(x):
    """Gram = M @ M.T in f32 via a Pallas kernel tiled over the feature axis."""
    n, d = x.shape

    if d <= 2 * _TD:
        # Single full-D block (block_shape == full array dims -> exempt from
        # the (8, 128) divisibility rule). No mask, grid of one step.
        td, k_tiles = d, 1
    else:
        td, k_tiles = _TD, pl.cdiv(d, _TD)

    # v7x megacore: split the D reduction across the two TensorCores when the
    # tile count splits evenly; each core builds its own partial Gram.
    if k_tiles >= 2 and k_tiles % 2 == 0:
        p, k_per = 2, k_tiles // 2
    else:
        p, k_per = 1, k_tiles

    needs_mask = (td * k_tiles) != d

    kernel = _make_gram_kernel(d=d, td=td, k_per=k_per, needs_mask=needs_mask)

    partials = pl.pallas_call(
        kernel,
        out_shape=jax.ShapeDtypeStruct((p, n, n), jnp.float32),
        grid_spec=pltpu.PrefetchScalarGridSpec(
            num_scalar_prefetch=0,
            grid=(p, k_per),
            in_specs=[pl.BlockSpec((n, td), lambda pi, ki: (0, pi * k_per + ki))],
            out_specs=pl.BlockSpec((1, n, n), lambda pi, ki: (pi, 0, 0)),
        ),
        compiler_params=pltpu.CompilerParams(
            dimension_semantics=("parallel", "arbitrary")),
    )(x)

    return jnp.sum(partials, axis=0)


@jax.jit
def _probe_stats(x, batch):
    """Returns (norm_mean, stable_rank) for M = x, reproducing the torch code."""
    x = lax.stop_gradient(x)  # torch records detached scalars (.item())
    n, _ = x.shape

    gram = _gram(x)                          # (n, n) = M @ M.T, f32
    diag = jnp.diagonal(gram)                # per-row ||M_i||^2
    row_norms = jnp.sqrt(diag)               # torch.linalg.norm(M, dim=1)
    fro2 = jnp.sum(diag)                     # trace(M M^T) == ||M||_F^2
    sigma2 = jnp.linalg.eigvalsh(gram)[-1]   # ||M||_2^2 (PSD Gram, exact)
    stable_rank = fro2 / sigma2

    # activation_norm(M, batch), with the original quirks:
    #   batch_size = batch.max(); loop b in range(batch_size) (last graph
    #   excluded); final division by (batch_size + 1).
    batch = batch.astype(jnp.int32)
    batch_size = jnp.max(batch)
    counts = jnp.zeros((n,), jnp.float32).at[batch].add(1.0)
    norm_sums = jnp.zeros((n,), jnp.float32).at[batch].add(row_norms)
    gid = jnp.arange(n, dtype=jnp.int32)
    per_graph = jnp.where(gid < batch_size,
                          norm_sums / jnp.maximum(counts, 1.0), 0.0)
    norm_mean = jnp.sum(per_graph) / (batch_size.astype(jnp.float32) + 1.0)

    return norm_mean, stable_rank


def activation_probe_forward(x, batch, training=True):
    """Pallas equivalent of ActivationProbe.forward (+ sim_activs probe).

    Returns (output, norm_mean, stable_rank). `output` is the input unchanged.
    The statistics are None on the eval / no-grad path (no kernel launched),
    matching the PyTorch module's early return.
    """
    if not training:
        return x, None, None
    norm_mean, stable_rank = _probe_stats(x, batch)
    # TODO(synk): the autograd.Function backward (identity grad) and the
    # Python-side list appends (.item() host sync) have no forward-pass Pallas
    # equivalent; the statistics are returned instead of mutating module state.
    return x, norm_mean, stable_rank


if __name__ == "__main__":
    key = jax.random.PRNGKey(0)

    def reference(x, batch):
        # Plain-JAX mirror of the PyTorch activation_norm / batch_stable_rank.
        M = x.astype(jnp.float32)
        all_norms = jnp.linalg.norm(M, axis=1)
        batch_size = int(jnp.max(batch))
        counts = jnp.bincount(batch, length=batch_size + 1)
        terms = [jnp.sum(jnp.where(batch == b, all_norms, 0.0)) / counts[b]
                 for b in range(batch_size)]
        norm_mean = (sum(terms) if terms else jnp.float32(0.0)) / (batch_size + 1)
        fro2 = jnp.sum(M * M)
        sigma = jnp.linalg.norm(M, ord=2)
        return jnp.float32(norm_mean), fro2 / (sigma ** 2)

    cases = [
        # small shape implied by the module: 8 nodes, 32 features, 3 graphs
        ((8, 32), jnp.array([0, 0, 0, 1, 1, 1, 2, 2], dtype=jnp.int32)),
        # larger feature dim: exercises the tiled + masked + 2-way-parallel path
        ((8, 4000), jnp.array([0, 0, 1, 1, 2, 2, 3, 3], dtype=jnp.int32)),
    ]

    x = None
    batch = None
    for shape, batch in cases:
        key, sub = jax.random.split(key)
        x = jax.random.normal(sub, shape, dtype=jnp.float32)

        out, norm_mean, stable_rank = activation_probe_forward(
            x, batch, training=True)
        out, norm_mean, stable_rank = jax.block_until_ready(
            (out, norm_mean, stable_rank))

        nm_ref, sr_ref = reference(x, batch)
        assert bool(jnp.array_equal(out, x)), "identity output mismatch"
        assert jnp.allclose(norm_mean, nm_ref, rtol=1e-4, atol=1e-4), (
            f"activation_norm mismatch ({shape}): {norm_mean} vs {nm_ref}")
        assert jnp.allclose(stable_rank, sr_ref, rtol=1e-3, atol=1e-3), (
            f"stable rank mismatch ({shape}): {stable_rank} vs {sr_ref}")

    # Eval / no-grad path: no pallas work at all, input returned untouched.
    out_eval, nm_eval, sr_eval = activation_probe_forward(x, batch, training=False)
    assert out_eval is x and nm_eval is None and sr_eval is None

    print("KERNEL_OK")
</pallas_src>

<mosaic_0001>
module attributes {stable_mosaic.version = 11 : i64} {
  func.func private @main(%arg0: i32) attributes {dimension_semantics = [#tpu.dimension_semantics<core_parallel>], iteration_bounds = array<i64: 2>, tpu.core_type = #tpu.core_type<sc_scalar_subcore>, window_params = []} {
    return
  }
}

module attributes {stable_mosaic.version = 11 : i64} {
  func.func private @main(%arg0: i32) attributes {dimension_semantics = [#tpu.dimension_semantics<core_parallel>], iteration_bounds = array<i64: 2>, tpu.core_type = #tpu.core_type<sc_scalar_subcore>, window_params = []} {
    return
  }
}

module attributes {stable_mosaic.version = 11 : i64} {
  func.func @kernel(%arg0: i32, %arg1: i32, %arg2: memref<8x32xf32, #tpu.memory_space<vmem>>, %arg3: memref<1x8x8xf32, #tpu.memory_space<vmem>>) attributes {dimension_semantics = [#tpu.dimension_semantics<parallel>, #tpu.dimension_semantics<arbitrary>], iteration_bounds = array<i64: 1, 1>, scalar_prefetch = 0 : i64, scratch_operands = 0 : i64, tpu.core_type = #tpu.core_type<tc>, window_params = [{transform_indices = @transform_0, window_bounds = array<i64: 8, 32>}, {transform_indices = @transform_1, window_bounds = array<i64: 1, 8, 8>}]} {
    %c0_i32 = arith.constant 0 : i32
    %0 = arith.cmpi eq, %arg1, %c0_i32 : i32
    %1 = arith.extui %0 : i1 to i32
    %c0_i32_0 = arith.constant 0 : i32
    %2 = arith.cmpi ne, %1, %c0_i32_0 : i32
    scf.if %2 {
      %cst_8 = arith.constant 0.000000e+00 : f32
      %9 = vector.broadcast %cst_8 : f32 to vector<1x8x8xf32>
      %c0_9 = arith.constant 0 : index
      %c0_10 = arith.constant 0 : index
      %c0_11 = arith.constant 0 : index
      %10 = vector.load %arg3[%c0_9, %c0_10, %c0_11] : memref<1x8x8xf32, #tpu.memory_space<vmem>>, vector<1x8x8xf32>
      tpu.vector_store %arg3[%c0_9, %c0_10, %c0_11], %9 {strides = array<i32>} : memref<1x8x8xf32, #tpu.memory_space<vmem>>, vector<1x8x8xf32>,
    } else {
    }
    %c0 = arith.constant 0 : index
    %c0_1 = arith.constant 0 : index
    %3 = vector.load %arg2[%c0, %c0_1] : memref<8x32xf32, #tpu.memory_space<vmem>>, vector<8x32xf32>
    %cst = arith.constant dense<0.000000e+00> : vector<8x8xf32>
    %4 = tpu.matmul %3, %3, %cst {dimension_numbers = #tpu.dot_dimension_numbers<[1], [1], [0], [0], [0, 0, 1, 0], [], []>} : vector<8x32xf32>, vector<8x32xf32>, vector<8x8xf32> -> vector<8x8xf32>
    %c0_2 = arith.constant 0 : index
    %c0_3 = arith.constant 0 : index
    %c0_4 = arith.constant 0 : index
    %5 = vector.load %arg3[%c0_2, %c0_3, %c0_4] : memref<1x8x8xf32, #tpu.memory_space<vmem>>, vector<1x8x8xf32>
    %6 = vector.shape_cast %4 : vector<8x8xf32> to vector<1x8x8xf32>
    %7 = arith.addf %5, %6 : vector<1x8x8xf32>
    %c0_5 = arith.constant 0 : index
    %c0_6 = arith.constant 0 : index
    %c0_7 = arith.constant 0 : index
    %8 = vector.load %arg3[%c0_5, %c0_6, %c0_7] : memref<1x8x8xf32, #tpu.memory_space<vmem>>, vector<1x8x8xf32>
    tpu.vector_store %arg3[%c0_5, %c0_6, %c0_7], %7 {strides = array<i32>} : memref<1x8x8xf32, #tpu.memory_space<vmem>>, vector<1x8x8xf32>,
    return
  }
  func.func @transform_0(%arg0: i32, %arg1: i32) -> (i32, i32) {
    %c1_i32 = arith.constant 1 : i32
    %0 = arith.muli %arg0, %c1_i32 : i32
    %1 = arith.addi %0, %arg1 : i32
    %c0_i32 = arith.constant 0 : i32
    %c0_i32_0 = arith.constant 0 : i32
    return %c0_i32, %1 : i32, i32
  }
  func.func @transform_1(%arg0: i32, %arg1: i32) -> (i32, i32, i32) {
    %c0_i32 = arith.constant 0 : i32
    %c0_i32_0 = arith.constant 0 : i32
    %c0_i32_1 = arith.constant 0 : i32
    return %arg0, %c0_i32, %c0_i32_0 : i32, i32, i32
  }
}

</mosaic_0001>

<llo_original>
// kernel: custom-call.3
$region0: #{custom-call.3}
  %s0 = inlined_call_operand.vmem [shape: f32[4,4], index: 0, kind: input, shape index: {}]
  %s1 = inlined_call_operand.vmem [shape: f32[4,4], index: 1, kind: input, shape index: {}]
  %s2 = inlined_call_operand.vmem [shape: f32[4,4], index: 2, kind: input, shape index: {}]
  %s3 = inlined_call_operand.vmem [shape: f32[4,4], index: 3, kind: input, shape index: {}]
  %s4 = inlined_call_operand.vmem [shape: f32[4], index: 4, kind: output, shape index: {0}]
  %s5 = inlined_call_operand.vmem [shape: f32[4], index: 5, kind: output, shape index: {1}]
  %s6 = inlined_call_operand.hbm [shape: f32[4,4], index: 6, kind: output, shape index: {2}]
  %s7 = inlined_call_operand.hbm [shape: f32[4,4], index: 7, kind: output, shape index: {3}]
  %s8 = inlined_call_operand.hbm [shape: f32[4,4], index: 8, kind: output, shape index: {4}]
  %s9 = inlined_call_operand.hbm [shape: f32[4,4], index: 9, kind: output, shape index: {5}]
  %10 = xla_tuple %s4, %s5, %s6, %s7, %s8, %s9
  $region1: #{custom-call.3} parent=0
    #allocation0 [shape = 'u8[4096]{0}', space=vmem, size = 0x1000, scoped, tag = 'operand span for operand 0']
    #allocation1 [shape = 'u8[2048]{0}', space=vmem, size = 0x800, scoped, tag = 'packed  for operand 0']
    #allocation2 [shape = 'u8[4096]{0}', space=vmem, size = 0x1000, scoped, tag = 'operand span for operand 1']
    #allocation3 [shape = 'u8[2048]{0}', space=vmem, size = 0x800, scoped, tag = 'packed  for operand 1']
    #allocation4 [shape = 'u8[4096]{0}', space=vmem, size = 0x1000, scoped, tag = 'operand span for operand 2']
    #allocation5 [shape = 'u8[2048]{0}', space=vmem, size = 0x800, scoped, tag = 'packed  for operand 2']
    #allocation6 [shape = 'u8[4096]{0}', space=vmem, size = 0x1000, scoped, tag = 'operand span for operand 3']
    #allocation7 [shape = 'u8[2048]{0}', space=vmem, size = 0x800, scoped, tag = 'packed  for operand 3']
    #allocation8 [shape = 'u8[4096]{0}', space=vmem, size = 0x1000, scoped, tag = 'operand span for operand 4']
    #allocation9 [shape = 'u8[512]{0}', space=vmem, size = 0x400, scoped, tag = 'packed  for operand 4']
    #allocation10 [shape = 'u8[4096]{0}', space=vmem, size = 0x1000, scoped, tag = 'operand span for operand 5']
    #allocation11 [shape = 'u8[512]{0}', space=vmem, size = 0x400, scoped, tag = 'packed  for operand 5']
    #allocation12 [shape = 'u8[4096]{0}', space=vmem, size = 0x1000, scoped, tag = 'operand span for operand 6']
    #allocation13 [shape = 'u8[2048]{0}', space=vmem, size = 0x800, scoped, tag = 'packed  for operand 6']
    #allocation14 [shape = 's32[1]{0}', space=sflag, size = 0x4, scoped, tag = 'scoped memory for custom-call.3']
    #allocation15 [shape = 'u8[4096]{0}', space=vmem, size = 0x1000, scoped, tag = 'operand span for operand 7']
    #allocation16 [shape = 'u8[2048]{0}', space=vmem, size = 0x800, scoped, tag = 'packed  for operand 7']
    #allocation17 [shape = 's32[1]{0}', space=sflag, size = 0x4, scoped, tag = 'scoped memory for custom-call.3']
    #allocation18 [shape = 'u8[4096]{0}', space=vmem, size = 0x1000, scoped, tag = 'operand span for operand 8']
    #allocation19 [shape = 'u8[2048]{0}', space=vmem, size = 0x800, scoped, tag = 'packed  for operand 8']
    #allocation20 [shape = 'u8[4096]{0}', space=vmem, size = 0x1000, scoped, tag = 'operand span for operand 9']
    #allocation21 [shape = 'u8[2048]{0}', space=vmem, size = 0x800, scoped, tag = 'packed  for operand 9']
    #allocation22 [shape = 's32[1]{0}', space=sflag, size = 0x4, scoped, tag = 'scoped memory for custom-call.3']
    #allocation23 [shape = 'f32[4,4]{1,0}', space=vmem, size = 0x1000, scoped, tag = 'a top-left matrix']
    #allocation24 [shape = 'f32[4,4]{1,0}', space=vmem, size = 0x1000, scoped, tag = 'a top-right matrix']
    #allocation25 [shape = 'f32[4,4]{1,0}', space=vmem, size = 0x1000, scoped, tag = 'a bottom-left matrix']
    #allocation26 [shape = 'f32[4,4]{1,0}', space=vmem, size = 0x1000, scoped, tag = 'a bottom-right matrix']
    %11 = vsyncpa [#allocation14], 0
    %12 = vsyncpa [#allocation17], 0
    %13 = vsyncpa [#allocation22], 0
    %p15 = scmp.gt.s32.totalorder 4, 0
    // Predicated region
    $region2: #{custom-call.3} parent=1 // pred_check
      %p16 = pneg %p15
    $region3: #{custom-call.3} parent=1 // pred_check_branch
      %18 = sbr.rel (%p16) target = $region5
    $region4: #{custom-call.3} parent=1 // pred_region
      %s19 = sshra.s32 4, 3
      %p20 = scmp.gt.s32.totalorder %s19, 0
      // Predicated region
      $region6: #{custom-call.3} parent=4 // pred_check
        %p21 = pneg %p20
      $region7: #{custom-call.3} parent=4 // pred_check_branch
        %23 = sbr.rel (%p21) target = $region9
      $region8: #{custom-call.3} parent=4 // pred_region
        %s24 = ssub.s32 %s19, 1
        %s25 = smul.u32 %s24, 128
        %s26 = sshra.s32 %s25, 4
        %s27 = scalar_lea.vmem %s0, %s26
        %v28 = vld [vmem:[%s0] sm:$0xff]
        // While loop
        $region10: #{custom-call.3} parent=8 // loop_pre_header
          _
        $region11: #{custom-call.3} parent=8 // loop_header
          %s29 = sphi %s0, %s51
          %s30 = sphi [#allocation1], %s52
          %v31 = vphi %v28, %v53
          %s32 = ssub.s32 %s27, 64
          %p33 = scmp.gt.s32.totalorder %s29, %s32
        $region12: #{custom-call.3} parent=8 // loop_header_branch
          %35 = sbr.rel (%p33) target = $region16
        $region13: #{custom-call.3} parent=8 // loop_body
          %36 = vst [vmem:[%s30] sm:$0xff] %v31
          %v37 = vld [vmem:[%s29 + $0x8] sm:$0xff]
          %38 = vst [vmem:[%s30 + $0x8] sm:$0xff] %v37
          %v39 = vld [vmem:[%s29 + $0x10] sm:$0xff]
          %40 = vst [vmem:[%s30 + $0x10] sm:$0xff] %v39
          %v41 = vld [vmem:[%s29 + $0x18] sm:$0xff]
          %42 = vst [vmem:[%s30 + $0x18] sm:$0xff] %v41
          %v43 = vld [vmem:[%s29 + $0x20] sm:$0xff]
          %44 = vst [vmem:[%s30 + $0x20] sm:$0xff] %v43
          %v45 = vld [vmem:[%s29 + $0x28] sm:$0xff]
          %46 = vst [vmem:[%s30 + $0x28] sm:$0xff] %v45
          %v47 = vld [vmem:[%s29 + $0x30] sm:$0xff]
          %48 = vst [vmem:[%s30 + $0x30] sm:$0xff] %v47
          %v49 = vld [vmem:[%s29 + $0x38] sm:$0xff]
          %50 = vst [vmem:[%s30 + $0x38] sm:$0xff] %v49
        $region14: #{custom-call.3} parent=8 // loop_footer
          %s51 = scalar_lea.vmem %s29, 64
          %s52 = scalar_lea.vmem %s30, 64
          %v53 = vld [vmem:[%s29 + $0x40] sm:$0xff]
        $region15: #{custom-call.3} parent=8 // loop_footer_branch
          %54 = sbr.rel target = $region11
        $region16: #{custom-call.3} parent=8 // loop_exit
          _
        // While loop
        $region17: #{custom-call.3} parent=8 // loop_pre_header
          _
        $region18: #{custom-call.3} parent=8 // loop_header
          %s55 = sphi %s29, %s63
          %s56 = sphi %s30, %s64
          %v57 = vphi %v31, %v57
          %p58 = scmp.gt.s32.totalorder %s55, %s27
        $region19: #{custom-call.3} parent=8 // loop_header_branch
          %60 = sbr.rel (%p58) target = $region23
        $region20: #{custom-call.3} parent=8 // loop_body
          %v61 = vld [vmem:[%s55] sm:$0xff]
          %62 = vst [vmem:[%s56] sm:$0xff] %v61
        $region21: #{custom-call.3} parent=8 // loop_footer
          %s63 = scalar_lea.vmem %s55, 8
          %s64 = scalar_lea.vmem %s56, 8
        $region22: #{custom-call.3} parent=8 // loop_footer_branch
          %65 = sbr.rel target = $region18
        $region23: #{custom-call.3} parent=8 // loop_exit
          _
      $region9: #{custom-call.3} parent=4 // pred_fallthru
        _
      %s66 = sand.u32 4, 7
      %s67 = sshll.u32 1, %s66
      %s68 = ssub.s32 %s67, 1
      %s69 = smul.u32 %s19, 128
      %s70 = sshra.s32 %s69, 4
      %s71 = scalar_lea.vmem [#allocation1], %s70
      %s72 = smul.u32 %s19, 128
      %s73 = sshra.s32 %s72, 4
      %s74 = scalar_lea.vmem %s0, %s73
      %v75 = vld [vmem:[%s74] sm:%s68]
      %76 = vst [vmem:[%s71] sm:%s68] %v75
    $region5: #{custom-call.3} parent=1 // pred_fallthru
      _
    %p78 = scmp.gt.s32.totalorder 4, 0
    // Predicated region
    $region24: #{custom-call.3} parent=1 // pred_check
      %p79 = pneg %p78
    $region25: #{custom-call.3} parent=1 // pred_check_branch
      %81 = sbr.rel (%p79) target = $region27
    $region26: #{custom-call.3} parent=1 // pred_region
      %s82 = sshra.s32 4, 3
      %p83 = scmp.gt.s32.totalorder %s82, 0
      // Predicated region
      $region28: #{custom-call.3} parent=26 // pred_check
        %p84 = pneg %p83
      $region29: #{custom-call.3} parent=26 // pred_check_branch
        %86 = sbr.rel (%p84) target = $region31
      $region30: #{custom-call.3} parent=26 // pred_region
        %s87 = ssub.s32 %s82, 1
        %s88 = smul.u32 %s87, 128
        %s89 = sshra.s32 %s88, 4
        %s90 = scalar_lea.vmem %s1, %s89
        %v91 = vld [vmem:[%s1] sm:$0xff]
        // While loop
        $region32: #{custom-call.3} parent=30 // loop_pre_header
          _
        $region33: #{custom-call.3} parent=30 // loop_header
          %s92 = sphi %s1, %s114
          %s93 = sphi [#allocation3], %s115
          %v94 = vphi %v91, %v116
          %s95 = ssub.s32 %s90, 64
          %p96 = scmp.gt.s32.totalorder %s92, %s95
        $region34: #{custom-call.3} parent=30 // loop_header_branch
          %98 = sbr.rel (%p96) target = $region38
        $region35: #{custom-call.3} parent=30 // loop_body
          %99 = vst [vmem:[%s93] sm:$0xff] %v94
          %v100 = vld [vmem:[%s92 + $0x8] sm:$0xff]
          %101 = vst [vmem:[%s93 + $0x8] sm:$0xff] %v100
          %v102 = vld [vmem:[%s92 + $0x10] sm:$0xff]
          %103 = vst [vmem:[%s93 + $0x10] sm:$0xff] %v102
          %v104 = vld [vmem:[%s92 + $0x18] sm:$0xff]
          %105 = vst [vmem:[%s93 + $0x18] sm:$0xff] %v104
          %v106 = vld [vmem:[%s92 + $0x20] sm:$0xff]
          %107 = vst [vmem:[%s93 + $0x20] sm:$0xff] %v106
          %v108 = vld [vmem:[%s92 + $0x28] sm:$0xff]
          %109 = vst [vmem:[%s93 + $0x28] sm:$0xff] %v108
          %v110 = vld [vmem:[%s92 + $0x30] sm:$0xff]
          %111 = vst [vmem:[%s93 + $0x30] sm:$0xff] %v110
          %v112 = vld [vmem:[%s92 + $0x38] sm:$0xff]
          %113 = vst [vmem:[%s93 + $0x38] sm:$0xff] %v112
        $region36: #{custom-call.3} parent=30 // loop_footer
          %s114 = scalar_lea.vmem %s92, 64
          %s115 = scalar_lea.vmem %s93, 64
          %v116 = vld [vmem:[%s92 + $0x40] sm:$0xff]
        $region37: #{custom-call.3} parent=30 // loop_footer_branch
          %117 = sbr.rel target = $region33
        $region38: #{custom-call.3} parent=30 // loop_exit
          _
        // While loop
        $region39: #{custom-call.3} parent=30 // loop_pre_header
          _
        $region40: #{custom-call.3} parent=30 // loop_header
          %s118 = sphi %s92, %s126
          %s119 = sphi %s93, %s127
          %v120 = vphi %v94, %v120
          %p121 = scmp.gt.s32.totalorder %s118, %s90
        $region41: #{custom-call.3} parent=30 // loop_header_branch
          %123 = sbr.rel (%p121) target = $region45
        $region42: #{custom-call.3} parent=30 // loop_body
          %v124 = vld [vmem:[%s118] sm:$0xff]
          %125 = vst [vmem:[%s119] sm:$0xff] %v124
        $region43: #{custom-call.3} parent=30 // loop_footer
          %s126 = scalar_lea.vmem %s118, 8
          %s127 = scalar_lea.vmem %s119, 8
        $region44: #{custom-call.3} parent=30 // loop_footer_branch
          %128 = sbr.rel target = $region40
        $region45: #{custom-call.3} parent=30 // loop_exit
          _
      $region31: #{custom-call.3} parent=26 // pred_fallthru
        _
      %s129 = sand.u32 4, 7
      %s130 = sshll.u32 1, %s129
      %s131 = ssub.s32 %s130, 1
      %s132 = smul.u32 %s82, 128
      %s133 = sshra.s32 %s132, 4
      %s134 = scalar_lea.vmem [#allocation3], %s133
      %s135 = smul.u32 %s82, 128
      %s136 = sshra.s32 %s135, 4
      %s137 = scalar_lea.vmem %s1, %s136
      %v138 = vld [vmem:[%s137] sm:%s131]
      %139 = vst [vmem:[%s134] sm:%s131] %v138
    $region27: #{custom-call.3} parent=1 // pred_fallthru
      _
    %p141 = scmp.gt.s32.totalorder 4, 0
    // Predicated region
    $region46: #{custom-call.3} parent=1 // pred_check
      %p142 = pneg %p141
    $region47: #{custom-call.3} parent=1 // pred_check_branch
      %144 = sbr.rel (%p142) target = $region49
    $region48: #{custom-call.3} parent=1 // pred_region
      %s145 = sshra.s32 4, 3
      %p146 = scmp.gt.s32.totalorder %s145, 0
      // Predicated region
      $region50: #{custom-call.3} parent=48 // pred_check
        %p147 = pneg %p146
      $region51: #{custom-call.3} parent=48 // pred_check_branch
        %149 = sbr.rel (%p147) target = $region53
      $region52: #{custom-call.3} parent=48 // pred_region
        %s150 = ssub.s32 %s145, 1
        %s151 = smul.u32 %s150, 128
        %s152 = sshra.s32 %s151, 4
        %s153 = scalar_lea.vmem %s2, %s152
        %v154 = vld [vmem:[%s2] sm:$0xff]
        // While loop
        $region54: #{custom-call.3} parent=52 // loop_pre_header
          _
        $region55: #{custom-call.3} parent=52 // loop_header
          %s155 = sphi %s2, %s177
          %s156 = sphi [#allocation5], %s178
          %v157 = vphi %v154, %v179
          %s158 = ssub.s32 %s153, 64
          %p159 = scmp.gt.s32.totalorder %s155, %s158
        $region56: #{custom-call.3} parent=52 // loop_header_branch
          %161 = sbr.rel (%p159) target = $region60
        $region57: #{custom-call.3} parent=52 // loop_body
          %162 = vst [vmem:[%s156] sm:$0xff] %v157
          %v163 = vld [vmem:[%s155 + $0x8] sm:$0xff]
          %164 = vst [vmem:[%s156 + $0x8] sm:$0xff] %v163
          %v165 = vld [vmem:[%s155 + $0x10] sm:$0xff]
          %166 = vst [vmem:[%s156 + $0x10] sm:$0xff] %v165
          %v167 = vld [vmem:[%s155 + $0x18] sm:$0xff]
          %168 = vst [vmem:[%s156 + $0x18] sm:$0xff] %v167
          %v169 = vld [vmem:[%s155 + $0x20] sm:$0xff]
          %170 = vst [vmem:[%s156 + $0x20] sm:$0xff] %v169
          %v171 = vld [vmem:[%s155 + $0x28] sm:$0xff]
          %172 = vst [vmem:[%s156 + $0x28] sm:$0xff] %v171
          %v173 = vld [vmem:[%s155 + $0x30] sm:$0xff]
          %174 = vst [vmem:[%s156 + $0x30] sm:$0xff] %v173
          %v175 = vld [vmem:[%s155 + $0x38] sm:$0xff]
          %176 = vst [vmem:[%s156 + $0x38] sm:$0xff] %v175
        $region58: #{custom-call.3} parent=52 // loop_footer
          %s177 = scalar_lea.vmem %s155, 64
          %s178 = scalar_lea.vmem %s156, 64
          %v179 = vld [vmem:[%s155 + $0x40] sm:$0xff]
        $region59: #{custom-call.3} parent=52 // loop_footer_branch
          %180 = sbr.rel target = $region55
        $region60: #{custom-call.3} parent=52 // loop_exit
          _
        // While loop
        $region61: #{custom-call.3} parent=52 // loop_pre_header
          _
        $region62: #{custom-call.3} parent=52 // loop_header
          %s181 = sphi %s155, %s189
          %s182 = sphi %s156, %s190
          %v183 = vphi %v157, %v183
          %p184 = scmp.gt.s32.totalorder %s181, %s153
        $region63: #{custom-call.3} parent=52 // loop_header_branch
          %186 = sbr.rel (%p184) target = $region67
        $region64: #{custom-call.3} parent=52 // loop_body
          %v187 = vld [vmem:[%s181] sm:$0xff]
          %188 = vst [vmem:[%s182] sm:$0xff] %v187
        $region65: #{custom-call.3} parent=52 // loop_footer
          %s189 = scalar_lea.vmem %s181, 8
          %s190 = scalar_lea.vmem %s182, 8
        $region66: #{custom-call.3} parent=52 // loop_footer_branch
          %191 = sbr.rel target = $region62
        $region67: #{custom-call.3} parent=52 // loop_exit
          _
      $region53: #{custom-call.3} parent=48 // pred_fallthru
        _
      %s192 = sand.u32 4, 7
      %s193 = sshll.u32 1, %s192
      %s194 = ssub.s32 %s193, 1
      %s195 = smul.u32 %s145, 128
      %s196 = sshra.s32 %s195, 4
      %s197 = scalar_lea.vmem [#allocation5], %s196
      %s198 = smul.u32 %s145, 128
      %s199 = sshra.s32 %s198, 4
      %s200 = scalar_lea.vmem %s2, %s199
      %v201 = vld [vmem:[%s200] sm:%s194]
      %202 = vst [vmem:[%s197] sm:%s194] %v201
    $region49: #{custom-call.3} parent=1 // pred_fallthru
      _
    %p204 = scmp.gt.s32.totalorder 4, 0
    // Predicated region
    $region68: #{custom-call.3} parent=1 // pred_check
      %p205 = pneg %p204
    $region69: #{custom-call.3} parent=1 // pred_check_branch
      %207 = sbr.rel (%p205) target = $region71
    $region70: #{custom-call.3} parent=1 // pred_region
      %s208 = sshra.s32 4, 3
      %p209 = scmp.gt.s32.totalorder %s208, 0
      // Predicated region
      $region72: #{custom-call.3} parent=70 // pred_check
        %p210 = pneg %p209
      $region73: #{custom-call.3} parent=70 // pred_check_branch
        %212 = sbr.rel (%p210) target = $region75
      $region74: #{custom-call.3} parent=70 // pred_region
        %s213 = ssub.s32 %s208, 1
        %s214 = smul.u32 %s213, 128
        %s215 = sshra.s32 %s214, 4
        %s216 = scalar_lea.vmem %s3, %s215
        %v217 = vld [vmem:[%s3] sm:$0xff]
        // While loop
        $region76: #{custom-call.3} parent=74 // loop_pre_header
          _
        $region77: #{custom-call.3} parent=74 // loop_header
          %s218 = sphi %s3, %s240
          %s219 = sphi [#allocation7], %s241
          %v220 = vphi %v217, %v242
          %s221 = ssub.s32 %s216, 64
          %p222 = scmp.gt.s32.totalorder %s218, %s221
        $region78: #{custom-call.3} parent=74 // loop_header_branch
          %224 = sbr.rel (%p222) target = $region82
        $region79: #{custom-call.3} parent=74 // loop_body
          %225 = vst [vmem:[%s219] sm:$0xff] %v220
          %v226 = vld [vmem:[%s218 + $0x8] sm:$0xff]
          %227 = vst [vmem:[%s219 + $0x8] sm:$0xff] %v226
          %v228 = vld [vmem:[%s218 + $0x10] sm:$0xff]
          %229 = vst [vmem:[%s219 + $0x10] sm:$0xff] %v228
          %v230 = vld [vmem:[%s218 + $0x18] sm:$0xff]
          %231 = vst [vmem:[%s219 + $0x18] sm:$0xff] %v230
          %v232 = vld [vmem:[%s218 + $0x20] sm:$0xff]
          %233 = vst [vmem:[%s219 + $0x20] sm:$0xff] %v232
          %v234 = vld [vmem:[%s218 + $0x28] sm:$0xff]
          %235 = vst [vmem:[%s219 + $0x28] sm:$0xff] %v234
          %v236 = vld [vmem:[%s218 + $0x30] sm:$0xff]
          %237 = vst [vmem:[%s219 + $0x30] sm:$0xff] %v236
          %v238 = vld [vmem:[%s218 + $0x38] sm:$0xff]
          %239 = vst [vmem:[%s219 + $0x38] sm:$0xff] %v238
        $region80: #{custom-call.3} parent=74 // loop_footer
          %s240 = scalar_lea.vmem %s218, 64
          %s241 = scalar_lea.vmem %s219, 64
          %v242 = vld [vmem:[%s218 + $0x40] sm:$0xff]
        $region81: #{custom-call.3} parent=74 // loop_footer_branch
          %243 = sbr.rel target = $region77
        $region82: #{custom-call.3} parent=74 // loop_exit
          _
        // While loop
        $region83: #{custom-call.3} parent=74 // loop_pre_header
          _
        $region84: #{custom-call.3} parent=74 // loop_header
          %s244 = sphi %s218, %s252
          %s245 = sphi %s219, %s253
          %v246 = vphi %v220, %v246
          %p247 = scmp.gt.s32.totalorder %s244, %s216
        $region85: #{custom-call.3} parent=74 // loop_header_branch
          %249 = sbr.rel (%p247) target = $region89
        $region86: #{custom-call.3} parent=74 // loop_body
          %v250 = vld [vmem:[%s244] sm:$0xff]
          %251 = vst [vmem:[%s245] sm:$0xff] %v250
        $region87: #{custom-call.3} parent=74 // loop_footer
          %s252 = scalar_lea.vmem %s244, 8
          %s253 = scalar_lea.vmem %s245, 8
        $region88: #{custom-call.3} parent=74 // loop_footer_branch
          %254 = sbr.rel target = $region84
        $region89: #{custom-call.3} parent=74 // loop_exit
          _
      $region75: #{custom-call.3} parent=70 // pred_fallthru
        _
      %s255 = sand.u32 4, 7
      %s256 = sshll.u32 1, %s255
      %s257 = ssub.s32 %s256, 1
      %s258 = smul.u32 %s208, 128
      %s259 = sshra.s32 %s258, 4
      %s260 = scalar_lea.vmem [#allocation7], %s259
      %s261 = smul.u32 %s208, 128
      %s262 = sshra.s32 %s261, 4
      %s263 = scalar_lea.vmem %s3, %s262
      %v264 = vld [vmem:[%s263] sm:%s257]
      %265 = vst [vmem:[%s260] sm:%s257] %v264
    $region71: #{custom-call.3} parent=1 // pred_fallthru
      _
    %s267 = sshll.u32 1, 4
    %s268 = ssub.s32 %s267, 1
    %v269 = vld [vmem:[#allocation1] sm:%s268]
    %270 = vst [vmem:[#allocation0] sm:%s268] %v269
    %s272 = sshll.u32 1, 4
    %s273 = ssub.s32 %s272, 1
    %v274 = vld [vmem:[#allocation3] sm:%s273]
    %275 = vst [vmem:[#allocation2] sm:%s273] %v274
    %s277 = sshll.u32 1, 4
    %s278 = ssub.s32 %s277, 1
    %v279 = vld [vmem:[#allocation5] sm:%s278]
    %280 = vst [vmem:[#allocation4] sm:%s278] %v279
    %s282 = sshll.u32 1, 4
    %s283 = ssub.s32 %s282, 1
    %v284 = vld [vmem:[#allocation7] sm:%s283]
    %285 = vst [vmem:[#allocation6] sm:%s283] %v284
    %s286 = smov [#allocation23]
    %v287 = vld [vmem:[#allocation0] sm:$0xff]
    %288 = vst [vmem:[%s286] sm:$0xff] %v287
    %s289 = smov [#allocation24]
    %v290 = vld [vmem:[#allocation2] sm:$0xff]
    %291 = vst [vmem:[%s289] sm:$0xff] %v290
    %s292 = smov [#allocation25]
    %v293 = vld [vmem:[#allocation4] sm:$0xff]
    %294 = vst [vmem:[%s292] sm:$0xff] %v293
    %s295 = smov [#allocation26]
    %v296 = vld [vmem:[#allocation6] sm:$0xff]
    %297 = vst [vmem:[%s295] sm:$0xff] %v296
    %298 = vst [vmem:[#allocation12] sm:$0xff] 0.0
    %299 = vst [vmem:[#allocation15] sm:$0xff] 0.0
    %300 = vst [vmem:[#allocation18] sm:$0xff] 0.0
    %301 = vst [vmem:[#allocation20] sm:$0xff] 0.0
    %s302 = smov [#allocation12]
    %v303 = vlaneseq
    %v304 = vand.u32 %v303, 127
    %v305 = vmov %v304
    %v306 = vlaneseq
    %v307 = vshrl.u32 %v306, 7
    %v308 = vmov %v307
    %v309 = vld [vmem:[%s302] sm:$0xf]
    %vm312 = vcmp.eq.s32.totalorder %v308, %v305
    %v313 = vsel %vm312, 1.0, %v309
    %314 = vst [vmem:[%s302] sm:$0xf] %v313
    %s315 = smov [#allocation20]
    %v316 = vlaneseq
    %v317 = vand.u32 %v316, 127
    %v318 = vmov %v317
    %v319 = vlaneseq
    %v320 = vshrl.u32 %v319, 7
    %v321 = vmov %v320
    %v322 = vld [vmem:[%s315] sm:$0xf]
    %vm325 = vcmp.eq.s32.totalorder %v321, %v318
    %v326 = vsel %vm325, 1.0, %v322
    %327 = vst [vmem:[%s315] sm:$0xf] %v326
    // While loop
    $region90: #{custom-call.3} parent=1 // loop_pre_header
      _
    $region91: #{custom-call.3} parent=1 // loop_header
      %s329 = sphi 0, %s871
      %v330 = vlaneseq
      %v331 = vand.u32 %v330, 127
      %v332 = vmov %v331
      %v333 = vlaneseq
      %v334 = vshrl.u32 %v333, 7
      %v335 = vmov %v334
      %s336 = smov [#allocation23]
      %v337 = vlaneseq
      %v338 = vand.u32 %v337, 127
      %vm339 = vcmp.ge.s32.totalorder %v338, 0
      %vm340 = vcmp.lt.s32.totalorder %v338, 4
      %vm341 = vmand %vm339, %vm340
      %v342 = vld [vmem:[%s336] sm:$0xf]
      %v343 = vsel %vm341, %v342, 0.0
      %v344 = vmul.f32 %v343, %v343
      %vm347 = vcmp.eq.s32.totalorder %v335, %v332
      %v348 = vsel %vm347, 0.0, %v344
      %v349 = vlaneseq
      %v350 = vand.u32 %v349, 127
      %v351 = vmov %v350
      %v352 = vlaneseq
      %v353 = vshrl.u32 %v352, 7
      %v354 = vmov %v353
      %s355 = smov [#allocation24]
      %v356 = vlaneseq
      %v357 = vand.u32 %v356, 127
      %vm358 = vcmp.ge.s32.totalorder %v357, 0
      %vm359 = vcmp.lt.s32.totalorder %v357, 4
      %vm360 = vmand %vm358, %vm359
      %v361 = vld [vmem:[%s355] sm:$0xf]
      %v362 = vsel %vm360, %v361, 0.0
      %v363 = vmul.f32 %v362, %v362
      %v364 = vadd.f32 %v348, %v363
      %v365 = vadd.f32 %v344, %v363
      %v366 = vlaneseq
      %v367 = vand.u32 %v366, 127
      %v368 = vmov %v367
      %v369 = vlaneseq
      %v370 = vshrl.u32 %v369, 7
      %v371 = vmov %v370
      %s372 = smov [#allocation25]
      %v373 = vlaneseq
      %v374 = vand.u32 %v373, 127
      %vm375 = vcmp.ge.s32.totalorder %v374, 0
      %vm376 = vcmp.lt.s32.totalorder %v374, 4
      %vm377 = vmand %vm375, %vm376
      %v378 = vld [vmem:[%s372] sm:$0xf]
      %v379 = vsel %vm377, %v378, 0.0
      %v380 = vmul.f32 %v379, %v379
      %v381 = vadd.f32 %v364, %v380
      %v382 = vadd.f32 %v365, %v380
      %v383 = vlaneseq
      %v384 = vand.u32 %v383, 127
      %v385 = vmov %v384
      %v386 = vlaneseq
      %v387 = vshrl.u32 %v386, 7
      %v388 = vmov %v387
      %s389 = smov [#allocation26]
      %v390 = vlaneseq
      %v391 = vand.u32 %v390, 127
      %vm392 = vcmp.ge.s32.totalorder %v391, 0
      %vm393 = vcmp.lt.s32.totalorder %v391, 4
      %vm394 = vmand %vm392, %vm393
      %v395 = vld [vmem:[%s389] sm:$0xf]
      %v396 = vsel %vm394, %v395, 0.0
      %v397 = vmul.f32 %v396, %v396
      %vm400 = vcmp.eq.s32.totalorder %v388, %v385
      %v401 = vsel %vm400, 0.0, %v397
      %v402 = vadd.f32 %v381, %v401
      %v403 = vadd.f32 %v382, %v397
      %404 = vadd.xlane.f32.xlu0 %v403
      %v405 = vpop.xlane.xlu0 %404
      %v406 = vrot.slane %v405, 4
      %v407 = vadd.f32 %v405, %v406
      %v408 = vrot.slane %v407, 2
      %v409 = vadd.f32 %v407, %v408
      %v410 = vrot.slane %v409, 1
      %v411 = vadd.f32 %v409, %v410
      %412 = vadd.xlane.f32.xlu0 %v402
      %v413 = vpop.xlane.xlu0 %412
      %v414 = vrot.slane %v413, 4
      %v415 = vadd.f32 %v413, %v414
      %v416 = vrot.slane %v415, 2
      %v417 = vadd.f32 %v415, %v416
      %v418 = vrot.slane %v417, 1
      %v419 = vadd.f32 %v417, %v418
      %s420 = vtos %v419
      %s421 = vtos %v411
      %s422 = smul.f32 1e-10, %s421
      %p423 = scmp.le.f32.partialorder %s420, %s422
      %p424 = scmp.ge.s32.totalorder %s329, 15
      %p425 = por %p423, %p424
    $region92: #{custom-call.3} parent=1 // loop_header_branch
      %873 = sbr.rel (%p425) target = $region96
    $region93: #{custom-call.3} parent=1 // loop_body
      loop: start=0, step=1, limit=7
      $region97: #{custom-call.3} parent=93 // loop_pre_header
        _
      $region98: #{custom-call.3} parent=93 // loop_header
        %s427 = sphi 0, %s431
        %p428 = scmp.ge.s32.totalorder %s427, 7
      $region99: #{custom-call.3} parent=93 // loop_header_branch
        %430 = sbr.rel (%p428) target = $region103
      $region100: #{custom-call.3} parent=93 // loop_body
        #allocation27 [shape = 'f32[1024]{0}', space=vmem, size = 0x1000, scoped, tag = 'a_tl_diag vmem']
        #allocation28 [shape = 'f32[1024]{0}', space=vmem, size = 0x1000, scoped, tag = 'a_tr_diag vmem']
        #allocation29 [shape = 'f32[1024]{0}', space=vmem, size = 0x1000, scoped, tag = 'a_br_diag vmem']
        #allocation30 [shape = 'f32[1024]{0}', space=vmem, size = 0x1000, scoped, tag = 'rt1 vmem']
        #allocation31 [shape = 'f32[1024]{0}', space=vmem, size = 0x1000, scoped, tag = 'rt2 vmem']
        #allocation32 [shape = 'f32[1024]{0}', space=vmem, size = 0x1000, scoped, tag = 'c vmem']
        #allocation33 [shape = 'f32[1024]{0}', space=vmem, size = 0x1000, scoped, tag = 's vmem']
        #allocation34 [shape = 'f32[4096]{0}', space=vmem, size = 0x4000, scoped, tag = 'c broadcast']
        #allocation35 [shape = 'f32[4096]{0}', space=vmem, size = 0x4000, scoped, tag = 's broadcast']
        %s432 = smov [#allocation23]
        %s433 = smov [#allocation27]
        %v434 = vlaneseq
        %v435 = vand.u32 %v434, 127
        %v436 = vmov %v435
        %v437 = vlaneseq
        %v438 = vshrl.u32 %v437, 7
        %v439 = vmov %v438
        %v440 = vld [vmem:[%s432] sm:$0xf]
        %vm443 = vcmp.eq.s32.totalorder %v439, %v436
        %v444 = vsel %vm443, %v440, 0.0
        %v445 = vrot.slane %v444, 4
        %v446 = vadd.f32 %v444, %v445
        %v447 = vrot.slane %v446, 2
        %v448 = vadd.f32 %v446, %v447
        %v449 = vrot.slane %v448, 1
        %v450 = vadd.f32 %v448, %v449
        %451 = vst [vmem:[%s433] sm:$0x1] %v450
        %s452 = smov [#allocation24]
        %s453 = smov [#allocation28]
        %v454 = vlaneseq
        %v455 = vand.u32 %v454, 127
        %v456 = vmov %v455
        %v457 = vlaneseq
        %v458 = vshrl.u32 %v457, 7
        %v459 = vmov %v458
        %v460 = vld [vmem:[%s452] sm:$0xf]
        %vm463 = vcmp.eq.s32.totalorder %v459, %v456
        %v464 = vsel %vm463, %v460, 0.0
        %v465 = vrot.slane %v464, 4
        %v466 = vadd.f32 %v464, %v465
        %v467 = vrot.slane %v466, 2
        %v468 = vadd.f32 %v466, %v467
        %v469 = vrot.slane %v468, 1
        %v470 = vadd.f32 %v468, %v469
        %471 = vst [vmem:[%s453] sm:$0x1] %v470
        %s472 = smov [#allocation26]
        %s473 = smov [#allocation29]
        %v474 = vlaneseq
        %v475 = vand.u32 %v474, 127
        %v476 = vmov %v475
        %v477 = vlaneseq
        %v478 = vshrl.u32 %v477, 7
        %v479 = vmov %v478
        %v480 = vld [vmem:[%s472] sm:$0xf]
        %vm483 = vcmp.eq.s32.totalorder %v479, %v476
        %v484 = vsel %vm483, %v480, 0.0
        %v485 = vrot.slane %v484, 4
        %v486 = vadd.f32 %v484, %v485
        %v487 = vrot.slane %v486, 2
        %v488 = vadd.f32 %v486, %v487
        %v489 = vrot.slane %v488, 1
        %v490 = vadd.f32 %v488, %v489
        %491 = vst [vmem:[%s473] sm:$0x1] %v490
        %s492 = smov [#allocation32]
        %s493 = smov [#allocation33]
        %s494 = smov [#allocation27]
        %v495 = vld [vmem:[%s494] sm:$0xff]
        %s496 = smov [#allocation28]
        %v497 = vld [vmem:[%s496] sm:$0xff]
        %s498 = smov [#allocation29]
        %v499 = vld [vmem:[%s498] sm:$0xff]
        %v500 = vsub.f32 %v499, %v495
        %v501 = vmul.f32 2.0, %v497
        %v502 = vrcp.pop %v501
        %v503 = vmul.f32 %v500, %v502
        %vm504 = vcmp.ge.f32.partialorder %v503, 0.0
        %v505 = vmul.f32 %v503, %v503
        %v506 = vadd.f32 1.0, %v505
        %v507 = vrsqrt.pop %v506
        %v508 = vmul.f32 %v506, %v507
        %vm509 = vcmp.eq.f32.partialorder %v506, inf
        %v510 = vsel %vm509, %v506, %v508
        %vm511 = vcmp.eq.f32.partialorder %v506, 0.0
        %v512 = vand.u32 %v506, 2147483648
        %v513 = vsel %vm511, %v512, %v510
        %v514 = vxor.u32 %v513, 2147483648
        %v515 = vsel %vm504, %v513, %v514
        %v516 = vadd.f32 %v503, %v515
        %v517 = vrcp.pop %v516
        %v518 = vand.u32 2147483647, %v495
        %v519 = vand.u32 2147483647, %v497
        %v520 = vand.u32 2147483647, %v499
        %v521 = vmin.f32 %v518, %v520
        %v522 = vmul.f32 1.1920929e-08, %v521
        %vm523 = vcmp.le.f32.partialorder %v519, %v522
        %v524 = vsel %vm523, 0.0, %v517
        %v525 = vmul.f32 %v524, %v524
        %v526 = vadd.f32 1.0, %v525
        %v527 = vrsqrt.pop %v526
        %v528 = vmul.f32 %v524, %v527
        %v529 = vmul.f32 %v524, %v497
        %v530 = vsub.f32 %v495, %v529
        %v531 = vmul.f32 %v524, %v497
        %v532 = vadd.f32 %v499, %v531
        %s533 = smov [#allocation30]
        %534 = vst [vmem:[%s533] sm:$0xff] %v530
        %s535 = smov [#allocation31]
        %536 = vst [vmem:[%s535] sm:$0xff] %v532
        %s537 = smov %s492
        %538 = vst [vmem:[%s537] sm:$0xff] %v527
        %s539 = smov %s493
        %540 = vst [vmem:[%s539] sm:$0xff] %v528
        %s541 = smov [#allocation32]
        %v542 = vld [vmem:[%s541] ss:$0 sm:$0xff]
        %v543 = vlaneseq
        %v544 = vand.u32 %v543, 127
        %v545 = vmov %v544
        %v546 = vlaneseq
        %v547 = vshrl.u32 %v546, 7
        %v548 = vmov %v547
        %vm550 = vcmp.eq.s32.totalorder %v548, %v545
        %v551 = vsel %vm550, %v542, 0.0
        %552 = vadd.xlane.f32.xlu0 %v551
        %v553 = vpop.xlane.xlu0 %552
        %s554 = smov [#allocation34]
        %555 = vst [vmem:[%s554] sm:$0xff] %v553
        %s556 = smov [#allocation33]
        %v557 = vld [vmem:[%s556] ss:$0 sm:$0xff]
        %v558 = vlaneseq
        %v559 = vand.u32 %v558, 127
        %v560 = vmov %v559
        %v561 = vlaneseq
        %v562 = vshrl.u32 %v561, 7
        %v563 = vmov %v562
        %vm565 = vcmp.eq.s32.totalorder %v563, %v560
        %v566 = vsel %vm565, %v557, 0.0
        %567 = vadd.xlane.f32.xlu0 %v566
        %v568 = vpop.xlane.xlu0 %567
        %s569 = smov [#allocation35]
        %570 = vst [vmem:[%s569] sm:$0xff] %v568
        %s571 = smov [#allocation34]
        %v572 = vld [vmem:[%s571] sm:$0xff]
        %s573 = smov [#allocation35]
        %v574 = vld [vmem:[%s573] sm:$0xff]
        %s575 = smov [#allocation23]
        %s576 = smov [#allocation24]
        %s577 = smov [#allocation25]
        %s578 = smov [#allocation26]
        %v579 = vld [vmem:[%s575] sm:$0xf]
        %v580 = vld [vmem:[%s576] sm:$0xf]
        %v581 = vld [vmem:[%s577] sm:$0xf]
        %v582 = vld [vmem:[%s578] sm:$0xf]
        %v583 = vmul.f32 %v572, %v579
        %v584 = vmul.f32 %v574, %v581
        %v585 = vsub.f32 %v583, %v584
        %v586 = vmul.f32 %v572, %v580
        %v587 = vmul.f32 %v574, %v582
        %v588 = vsub.f32 %v586, %v587
        %v589 = vmul.f32 %v574, %v579
        %v590 = vmul.f32 %v572, %v581
        %v591 = vadd.f32 %v589, %v590
        %v592 = vmul.f32 %v574, %v580
        %v593 = vmul.f32 %v572, %v582
        %v594 = vadd.f32 %v592, %v593
        %595 = vst [vmem:[%s575] sm:$0xf] %v585
        %596 = vst [vmem:[%s576] sm:$0xf] %v588
        %597 = vst [vmem:[%s577] sm:$0xf] %v591
        %598 = vst [vmem:[%s578] sm:$0xf] %v594
        %s599 = smov [#allocation32]
        %v600 = vld [vmem:[%s599] ss:$0 sm:$0xff]
        %s601 = smov [#allocation33]
        %v602 = vld [vmem:[%s601] ss:$0 sm:$0xff]
        %s603 = smov [#allocation23]
        %s604 = smov [#allocation24]
        %s605 = smov [#allocation25]
        %s606 = smov [#allocation26]
        %v607 = vld [vmem:[%s603] sm:$0xf]
        %v608 = vld [vmem:[%s604] sm:$0xf]
        %v609 = vld [vmem:[%s605] sm:$0xf]
        %v610 = vld [vmem:[%s606] sm:$0xf]
        %v611 = vmul.f32 %v600, %v607
        %v612 = vmul.f32 %v602, %v608
        %v613 = vsub.f32 %v611, %v612
        %v614 = vmul.f32 %v602, %v607
        %v615 = vmul.f32 %v600, %v608
        %v616 = vadd.f32 %v614, %v615
        %v617 = vmul.f32 %v600, %v609
        %v618 = vmul.f32 %v602, %v610
        %v619 = vsub.f32 %v617, %v618
        %v620 = vmul.f32 %v602, %v609
        %v621 = vmul.f32 %v600, %v610
        %v622 = vadd.f32 %v620, %v621
        %623 = vst [vmem:[%s603] sm:$0xf] %v613
        %624 = vst [vmem:[%s604] sm:$0xf] %v616
        %625 = vst [vmem:[%s605] sm:$0xf] %v619
        %626 = vst [vmem:[%s606] sm:$0xf] %v622
        %s627 = smov [#allocation23]
        %s628 = smov [#allocation30]
        %v629 = vlaneseq
        %v630 = vand.u32 %v629, 127
        %v631 = vmov %v630
        %v632 = vlaneseq
        %v633 = vshrl.u32 %v632, 7
        %v634 = vmov %v633
        %v635 = vld [vmem:[%s628] ss:$0 sm:$0xff]
        %v636 = vld [vmem:[%s627] sm:$0xf]
        %vm639 = vcmp.eq.s32.totalorder %v634, %v631
        %v640 = vsel %vm639, %v635, %v636
        %641 = vst [vmem:[%s627] sm:$0xf] %v640
        %s642 = smov [#allocation24]
        %v643 = vlaneseq
        %v644 = vand.u32 %v643, 127
        %v645 = vmov %v644
        %v646 = vlaneseq
        %v647 = vshrl.u32 %v646, 7
        %v648 = vmov %v647
        %v649 = vld [vmem:[%s642] sm:$0xf]
        %vm652 = vcmp.eq.s32.totalorder %v648, %v645
        %v653 = vsel %vm652, 0.0, %v649
        %654 = vst [vmem:[%s642] sm:$0xf] %v653
        %s655 = smov [#allocation25]
        %v656 = vlaneseq
        %v657 = vand.u32 %v656, 127
        %v658 = vmov %v657
        %v659 = vlaneseq
        %v660 = vshrl.u32 %v659, 7
        %v661 = vmov %v660
        %v662 = vld [vmem:[%s655] sm:$0xf]
        %vm665 = vcmp.eq.s32.totalorder %v661, %v658
        %v666 = vsel %vm665, 0.0, %v662
        %667 = vst [vmem:[%s655] sm:$0xf] %v666
        %s668 = smov [#allocation26]
        %s669 = smov [#allocation31]
        %v670 = vlaneseq
        %v671 = vand.u32 %v670, 127
        %v672 = vmov %v671
        %v673 = vlaneseq
        %v674 = vshrl.u32 %v673, 7
        %v675 = vmov %v674
        %v676 = vld [vmem:[%s669] ss:$0 sm:$0xff]
        %v677 = vld [vmem:[%s668] sm:$0xf]
        %vm680 = vcmp.eq.s32.totalorder %v675, %v672
        %v681 = vsel %vm680, %v676, %v677
        %682 = vst [vmem:[%s668] sm:$0xf] %v681
        %s683 = smov [#allocation23]
        %s684 = smov [#allocation24]
        %v685 = vld [vmem:[%s684] sm:$0xf]
        %686 = vrot.lane.b32.xlu0 %v685, 1
        %v687 = vpop.permute.xlu0 %686
        %v688 = vld [vmem:[%s683] sm:$0xf]
        %v689 = vld [vmem:[%s683] sm:$0xf]
        %690 = vrot.lane.b32.xlu0 %v689, 1
        %v691 = vpop.permute.xlu0 %690
        %v692 = vlaneseq
        %v693 = vand.u32 %v692, 127
        %vm694 = vcmp.eq.s32.totalorder %v693, 0
        %v695 = vsel %vm694, %v689, %v691
        %v696 = vlaneseq
        %v697 = vand.u32 %v696, 127
        %vm698 = vcmp.eq.s32.totalorder %v697, 1
        %v699 = vsel %vm698, %v687, %v695
        %v700 = vlaneseq
        %v701 = vand.u32 %v700, 127
        %vm702 = vcmp.ge.s32.totalorder %v701, 0
        %vm703 = vcmp.lt.s32.totalorder %v701, 4
        %vm704 = vmand %vm702, %vm703
        %v705 = vsel %vm704, %v699, 0.0
        %v706 = vld [vmem:[%s684] sm:$0xf]
        %707 = vrot.lane.b32.xlu0 %v706, 127
        %v708 = vpop.permute.xlu0 %707
        %v709 = vlaneseq
        %v710 = vand.u32 %v709, 127
        %vm711 = vcmp.eq.s32.totalorder %v710, 3
        %v712 = vsel %vm711, %v688, %v708
        %713 = vst [vmem:[%s683] sm:$0xf] %v705
        %714 = vst [vmem:[%s684] sm:$0xf] %v712
        %s715 = smov [#allocation25]
        %s716 = smov [#allocation26]
        %v717 = vld [vmem:[%s716] sm:$0xf]
        %718 = vrot.lane.b32.xlu0 %v717, 1
        %v719 = vpop.permute.xlu0 %718
        %v720 = vld [vmem:[%s715] sm:$0xf]
        %v721 = vld [vmem:[%s715] sm:$0xf]
        %722 = vrot.lane.b32.xlu0 %v721, 1
        %v723 = vpop.permute.xlu0 %722
        %v724 = vlaneseq
        %v725 = vand.u32 %v724, 127
        %vm726 = vcmp.eq.s32.totalorder %v725, 0
        %v727 = vsel %vm726, %v721, %v723
        %v728 = vlaneseq
        %v729 = vand.u32 %v728, 127
        %vm730 = vcmp.eq.s32.totalorder %v729, 1
        %v731 = vsel %vm730, %v719, %v727
        %v732 = vlaneseq
        %v733 = vand.u32 %v732, 127
        %vm734 = vcmp.ge.s32.totalorder %v733, 0
        %vm735 = vcmp.lt.s32.totalorder %v733, 4
        %vm736 = vmand %vm734, %vm735
        %v737 = vsel %vm736, %v731, 0.0
        %v738 = vld [vmem:[%s716] sm:$0xf]
        %739 = vrot.lane.b32.xlu0 %v738, 127
        %v740 = vpop.permute.xlu0 %739
        %v741 = vlaneseq
        %v742 = vand.u32 %v741, 127
        %vm743 = vcmp.eq.s32.totalorder %v742, 3
        %v744 = vsel %vm743, %v720, %v740
        %745 = vst [vmem:[%s715] sm:$0xf] %v737
        %746 = vst [vmem:[%s716] sm:$0xf] %v744
        %s747 = smov [#allocation23]
        %s748 = smov [#allocation25]
        %v749 = vld [vmem:[%s747] ss:$0 sm:$0xff]
        %s751 = scalar_lea.vmem %s747, 4294967295
        %v752 = vld [vmem:[%s751] sm:$0xe]
        %v753 = vlaneseq
        %v754 = vshrl.u32 %v753, 7
        %vm755 = vcmp.eq.s32.totalorder %v754, 0
        %v756 = vsel %vm755, %v749, %v752
        %s757 = scalar_lea.vmem %s747, 3
        %v758 = vld [vmem:[%s757] ss:$0 sm:$0xff]
        %759 = vst [vmem:[%s747] sm:$0xf] %v756
        %v760 = vld [vmem:[%s748] ss:$0 sm:$0xff]
        %s761 = scalar_lea.vmem %s747, 1
        %762 = vst [vmem:[%s761] sm:$0x1] %v760
        %s763 = scalar_lea.vmem %s748, 1
        %v764 = vld [vmem:[%s763] sm:$0x7]
        %v765 = vlaneseq
        %v766 = vshrl.u32 %v765, 7
        %vm767 = vcmp.eq.s32.totalorder %v766, 3
        %v768 = vsel %vm767, %v758, %v764
        %v769 = vld [vmem:[%s748] ss:$0 sm:$0xff]
        %770 = vst [vmem:[%s748] sm:$0xf] %v768
        %s771 = smov [#allocation24]
        %s772 = smov [#allocation26]
        %v773 = vld [vmem:[%s771] ss:$0 sm:$0xff]
        %s775 = scalar_lea.vmem %s771, 4294967295
        %v776 = vld [vmem:[%s775] sm:$0xe]
        %v777 = vlaneseq
        %v778 = vshrl.u32 %v777, 7
        %vm779 = vcmp.eq.s32.totalorder %v778, 0
        %v780 = vsel %vm779, %v773, %v776
        %s781 = scalar_lea.vmem %s771, 3
        %v782 = vld [vmem:[%s781] ss:$0 sm:$0xff]
        %783 = vst [vmem:[%s771] sm:$0xf] %v780
        %v784 = vld [vmem:[%s772] ss:$0 sm:$0xff]
        %s785 = scalar_lea.vmem %s771, 1
        %786 = vst [vmem:[%s785] sm:$0x1] %v784
        %s787 = scalar_lea.vmem %s772, 1
        %v788 = vld [vmem:[%s787] sm:$0x7]
        %v789 = vlaneseq
        %v790 = vshrl.u32 %v789, 7
        %vm791 = vcmp.eq.s32.totalorder %v790, 3
        %v792 = vsel %vm791, %v782, %v788
        %v793 = vld [vmem:[%s772] ss:$0 sm:$0xff]
        %794 = vst [vmem:[%s772] sm:$0xf] %v792
        %s795 = smov [#allocation34]
        %v796 = vld [vmem:[%s795] sm:$0xff]
        %s797 = smov [#allocation35]
        %v798 = vld [vmem:[%s797] sm:$0xff]
        %s799 = smov [#allocation12]
        %s800 = smov [#allocation15]
        %s801 = smov [#allocation18]
        %s802 = smov [#allocation20]
        %v803 = vld [vmem:[%s799] sm:$0xf]
        %v804 = vld [vmem:[%s800] sm:$0xf]
        %v805 = vld [vmem:[%s801] sm:$0xf]
        %v806 = vld [vmem:[%s802] sm:$0xf]
        %v807 = vmul.f32 %v796, %v803
        %v808 = vmul.f32 %v798, %v805
        %v809 = vsub.f32 %v807, %v808
        %v810 = vmul.f32 %v796, %v804
        %v811 = vmul.f32 %v798, %v806
        %v812 = vsub.f32 %v810, %v811
        %v813 = vmul.f32 %v798, %v803
        %v814 = vmul.f32 %v796, %v805
        %v815 = vadd.f32 %v813, %v814
        %v816 = vmul.f32 %v798, %v804
        %v817 = vmul.f32 %v796, %v806
        %v818 = vadd.f32 %v816, %v817
        %819 = vst [vmem:[%s799] sm:$0xf] %v809
        %820 = vst [vmem:[%s800] sm:$0xf] %v812
        %821 = vst [vmem:[%s801] sm:$0xf] %v815
        %822 = vst [vmem:[%s802] sm:$0xf] %v818
        %s823 = smov [#allocation12]
        %s824 = smov [#allocation18]
        %v825 = vld [vmem:[%s823] ss:$0 sm:$0xff]
        %s827 = scalar_lea.vmem %s823, 4294967295
        %v828 = vld [vmem:[%s827] sm:$0xe]
        %v829 = vlaneseq
        %v830 = vshrl.u32 %v829, 7
        %vm831 = vcmp.eq.s32.totalorder %v830, 0
        %v832 = vsel %vm831, %v825, %v828
        %s833 = scalar_lea.vmem %s823, 3
        %v834 = vld [vmem:[%s833] ss:$0 sm:$0xff]
        %835 = vst [vmem:[%s823] sm:$0xf] %v832
        %v836 = vld [vmem:[%s824] ss:$0 sm:$0xff]
        %s837 = scalar_lea.vmem %s823, 1
        %838 = vst [vmem:[%s837] sm:$0x1] %v836
        %s839 = scalar_lea.vmem %s824, 1
        %v840 = vld [vmem:[%s839] sm:$0x7]
        %v841 = vlaneseq
        %v842 = vshrl.u32 %v841, 7
        %vm843 = vcmp.eq.s32.totalorder %v842, 3
        %v844 = vsel %vm843, %v834, %v840
        %v845 = vld [vmem:[%s824] ss:$0 sm:$0xff]
        %846 = vst [vmem:[%s824] sm:$0xf] %v844
        %s847 = smov [#allocation15]
        %s848 = smov [#allocation20]
        %v849 = vld [vmem:[%s847] ss:$0 sm:$0xff]
        %s851 = scalar_lea.vmem %s847, 4294967295
        %v852 = vld [vmem:[%s851] sm:$0xe]
        %v853 = vlaneseq
        %v854 = vshrl.u32 %v853, 7
        %vm855 = vcmp.eq.s32.totalorder %v854, 0
        %v856 = vsel %vm855, %v849, %v852
        %s857 = scalar_lea.vmem %s847, 3
        %v858 = vld [vmem:[%s857] ss:$0 sm:$0xff]
        %859 = vst [vmem:[%s847] sm:$0xf] %v856
        %v860 = vld [vmem:[%s848] ss:$0 sm:$0xff]
        %s861 = scalar_lea.vmem %s847, 1
        %862 = vst [vmem:[%s861] sm:$0x1] %v860
        %s863 = scalar_lea.vmem %s848, 1
        %v864 = vld [vmem:[%s863] sm:$0x7]
        %v865 = vlaneseq
        %v866 = vshrl.u32 %v865, 7
        %vm867 = vcmp.eq.s32.totalorder %v866, 3
        %v868 = vsel %vm867, %v858, %v864
        %v869 = vld [vmem:[%s848] ss:$0 sm:$0xff]
        %870 = vst [vmem:[%s848] sm:$0xf] %v868
      $region101: #{custom-call.3} parent=93 // loop_footer
        %s431 = sadd.s32 1, %s427
      $region102: #{custom-call.3} parent=93 // loop_footer_branch
        %426 = sbr.rel target = $region98
      $region103: #{custom-call.3} parent=93 // loop_exit
        _
      %s871 = sadd.s32 %s329, 1
    $region94: #{custom-call.3} parent=1 // loop_footer
      _
    $region95: #{custom-call.3} parent=1 // loop_footer_branch
      %328 = sbr.rel target = $region91
    $region96: #{custom-call.3} parent=1 // loop_exit
      _
    %s874 = smov [#allocation23]
    %s875 = smov [#allocation8]
    %v876 = vlaneseq
    %v877 = vand.u32 %v876, 127
    %v878 = vmov %v877
    %v879 = vlaneseq
    %v880 = vshrl.u32 %v879, 7
    %v881 = vmov %v880
    %v882 = vld [vmem:[%s874] sm:$0xf]
    %vm885 = vcmp.eq.s32.totalorder %v881, %v878
    %v886 = vsel %vm885, %v882, 0.0
    %v887 = vrot.slane %v886, 4
    %v888 = vadd.f32 %v886, %v887
    %v889 = vrot.slane %v888, 2
    %v890 = vadd.f32 %v888, %v889
    %v891 = vrot.slane %v890, 1
    %v892 = vadd.f32 %v890, %v891
    %893 = vst [vmem:[%s875] sm:$0x1] %v892
    %s894 = smov [#allocation26]
    %s895 = smov [#allocation10]
    %v896 = vlaneseq
    %v897 = vand.u32 %v896, 127
    %v898 = vmov %v897
    %v899 = vlaneseq
    %v900 = vshrl.u32 %v899, 7
    %v901 = vmov %v900
    %v902 = vld [vmem:[%s894] sm:$0xf]
    %vm905 = vcmp.eq.s32.totalorder %v901, %v898
    %v906 = vsel %vm905, %v902, 0.0
    %v907 = vrot.slane %v906, 4
    %v908 = vadd.f32 %v906, %v907
    %v909 = vrot.slane %v908, 2
    %v910 = vadd.f32 %v908, %v909
    %v911 = vrot.slane %v910, 1
    %v912 = vadd.f32 %v910, %v911
    %913 = vst [vmem:[%s895] sm:$0x1] %v912
    %s915 = sshll.u32 1, 1
    %s916 = ssub.s32 %s915, 1
    %v918 = vld [vmem:[#allocation8] sm:%s916]
    %s919 = sshll.u32 1, 1
    %s920 = ssub.s32 %s919, 1
    %921 = vst [vmem:[#allocation9] sm:%s920] %v918
    %s923 = sshll.u32 1, 1
    %s924 = ssub.s32 %s923, 1
    %v926 = vld [vmem:[#allocation10] sm:%s924]
    %s927 = sshll.u32 1, 1
    %s928 = ssub.s32 %s927, 1
    %929 = vst [vmem:[#allocation11] sm:%s928] %v926
    %s931 = sshll.u32 1, 4
    %s932 = ssub.s32 %s931, 1
    %v934 = vld [vmem:[#allocation12] sm:%s932]
    %s935 = sshll.u32 1, 4
    %s936 = ssub.s32 %s935, 1
    %937 = vst [vmem:[#allocation13] sm:%s936] %v934
    %s939 = sshll.u32 1, 4
    %s940 = ssub.s32 %s939, 1
    %v942 = vld [vmem:[#allocation15] sm:%s940]
    %s943 = sshll.u32 1, 4
    %s944 = ssub.s32 %s943, 1
    %945 = vst [vmem:[#allocation16] sm:%s944] %v942
    %s947 = sshll.u32 1, 4
    %s948 = ssub.s32 %s947, 1
    %v950 = vld [vmem:[#allocation18] sm:%s948]
    %s951 = sshll.u32 1, 4
    %s952 = ssub.s32 %s951, 1
    %953 = vst [vmem:[#allocation19] sm:%s952] %v950
    %s955 = sshll.u32 1, 4
    %s956 = ssub.s32 %s955, 1
    %v958 = vld [vmem:[#allocation20] sm:%s956]
    %s959 = sshll.u32 1, 4
    %s960 = ssub.s32 %s959, 1
    %961 = vst [vmem:[#allocation21] sm:%s960] %v958
    // Predicated region
    $region104: #{custom-call.3} parent=1 // pred_check
      _
    $region105: #{custom-call.3} parent=1 // pred_check_branch
      %963 = sbr.rel (0) target = $region107
    $region106: #{custom-call.3} parent=1 // pred_region
      %p965 = scmp.gt.s32.totalorder 1, 0
      // Predicated region
      $region108: #{custom-call.3} parent=106 // pred_check
        %p966 = pneg %p965
      $region109: #{custom-call.3} parent=106 // pred_check_branch
        %968 = sbr.rel (%p966) target = $region111
      $region110: #{custom-call.3} parent=106 // pred_region
        %s969 = sshra.s32 1, 3
        %p970 = scmp.gt.s32.totalorder %s969, 0
        // Predicated region
        $region112: #{custom-call.3} parent=110 // pred_check
          %p971 = pneg %p970
        $region113: #{custom-call.3} parent=110 // pred_check_branch
          %973 = sbr.rel (%p971) target = $region115
        $region114: #{custom-call.3} parent=110 // pred_region
          %s974 = ssub.s32 %s969, 1
          %s975 = smul.u32 %s974, 128
          %s976 = sshra.s32 %s975, 4
          %s977 = scalar_lea.vmem [#allocation9], %s976
          %v978 = vld [vmem:[#allocation9] sm:$0xff]
          // While loop
          $region116: #{custom-call.3} parent=114 // loop_pre_header
            _
          $region117: #{custom-call.3} parent=114 // loop_header
            %s979 = sphi [#allocation9], %s1001
            %s980 = sphi %s4, %s1002
            %v981 = vphi %v978, %v1003
            %s982 = ssub.s32 %s977, 64
            %p983 = scmp.gt.s32.totalorder %s979, %s982
          $region118: #{custom-call.3} parent=114 // loop_header_branch
            %985 = sbr.rel (%p983) target = $region122
          $region119: #{custom-call.3} parent=114 // loop_body
            %986 = vst [vmem:[%s980] sm:$0xff] %v981
            %v987 = vld [vmem:[%s979 + $0x8] sm:$0xff]
            %988 = vst [vmem:[%s980 + $0x8] sm:$0xff] %v987
            %v989 = vld [vmem:[%s979 + $0x10] sm:$0xff]
            %990 = vst [vmem:[%s980 + $0x10] sm:$0xff] %v989
            %v991 = vld [vmem:[%s979 + $0x18] sm:$0xff]
            %992 = vst [vmem:[%s980 + $0x18] sm:$0xff] %v991
            %v993 = vld [vmem:[%s979 + $0x20] sm:$0xff]
            %994 = vst [vmem:[%s980 + $0x20] sm:$0xff] %v993
            %v995 = vld [vmem:[%s979 + $0x28] sm:$0xff]
            %996 = vst [vmem:[%s980 + $0x28] sm:$0xff] %v995
            %v997 = vld [vmem:[%s979 + $0x30] sm:$0xff]
            %998 = vst [vmem:[%s980 + $0x30] sm:$0xff] %v997
            %v999 = vld [vmem:[%s979 + $0x38] sm:$0xff]
            %1000 = vst [vmem:[%s980 + $0x38] sm:$0xff] %v999
          $region120: #{custom-call.3} parent=114 // loop_footer
            %s1001 = scalar_lea.vmem %s979, 64
            %s1002 = scalar_lea.vmem %s980, 64
            %v1003 = vld [vmem:[%s979 + $0x40] sm:$0xff]
          $region121: #{custom-call.3} parent=114 // loop_footer_branch
            %1004 = sbr.rel target = $region117
          $region122: #{custom-call.3} parent=114 // loop_exit
            _
          // While loop
          $region123: #{custom-call.3} parent=114 // loop_pre_header
            _
          $region124: #{custom-call.3} parent=114 // loop_header
            %s1005 = sphi %s979, %s1013
            %s1006 = sphi %s980, %s1014
            %v1007 = vphi %v981, %v1007
            %p1008 = scmp.gt.s32.totalorder %s1005, %s977
          $region125: #{custom-call.3} parent=114 // loop_header_branch
            %1010 = sbr.rel (%p1008) target = $region129
          $region126: #{custom-call.3} parent=114 // loop_body
            %v1011 = vld [vmem:[%s1005] sm:$0xff]
            %1012 = vst [vmem:[%s1006] sm:$0xff] %v1011
          $region127: #{custom-call.3} parent=114 // loop_footer
            %s1013 = scalar_lea.vmem %s1005, 8
            %s1014 = scalar_lea.vmem %s1006, 8
          $region128: #{custom-call.3} parent=114 // loop_footer_branch
            %1015 = sbr.rel target = $region124
          $region129: #{custom-call.3} parent=114 // loop_exit
            _
        $region115: #{custom-call.3} parent=110 // pred_fallthru
          _
        %s1016 = sand.u32 1, 7
        %s1017 = sshll.u32 1, %s1016
        %s1018 = ssub.s32 %s1017, 1
        %s1019 = smul.u32 %s969, 128
        %s1020 = sshra.s32 %s1019, 4
        %s1021 = scalar_lea.vmem %s4, %s1020
        %s1022 = smul.u32 %s969, 128
        %s1023 = sshra.s32 %s1022, 4
        %s1024 = scalar_lea.vmem [#allocation9], %s1023
        %v1025 = vld [vmem:[%s1024] sm:%s1018]
        %1026 = vst [vmem:[%s1021] sm:%s1018] %v1025
      $region111: #{custom-call.3} parent=106 // pred_fallthru
        _
    $region107: #{custom-call.3} parent=1 // pred_fallthru
      _
    // Predicated region
    $region130: #{custom-call.3} parent=1 // pred_check
      _
    $region131: #{custom-call.3} parent=1 // pred_check_branch
      %1028 = sbr.rel (0) target = $region133
    $region132: #{custom-call.3} parent=1 // pred_region
      %p1030 = scmp.gt.s32.totalorder 1, 0
      // Predicated region
      $region134: #{custom-call.3} parent=132 // pred_check
        %p1031 = pneg %p1030
      $region135: #{custom-call.3} parent=132 // pred_check_branch
        %1033 = sbr.rel (%p1031) target = $region137
      $region136: #{custom-call.3} parent=132 // pred_region
        %s1034 = sshra.s32 1, 3
        %p1035 = scmp.gt.s32.totalorder %s1034, 0
        // Predicated region
        $region138: #{custom-call.3} parent=136 // pred_check
          %p1036 = pneg %p1035
        $region139: #{custom-call.3} parent=136 // pred_check_branch
          %1038 = sbr.rel (%p1036) target = $region141
        $region140: #{custom-call.3} parent=136 // pred_region
          %s1039 = ssub.s32 %s1034, 1
          %s1040 = smul.u32 %s1039, 128
          %s1041 = sshra.s32 %s1040, 4
          %s1042 = scalar_lea.vmem [#allocation11], %s1041
          %v1043 = vld [vmem:[#allocation11] sm:$0xff]
          // While loop
          $region142: #{custom-call.3} parent=140 // loop_pre_header
            _
          $region143: #{custom-call.3} parent=140 // loop_header
            %s1044 = sphi [#allocation11], %s1066
            %s1045 = sphi %s5, %s1067
            %v1046 = vphi %v1043, %v1068
            %s1047 = ssub.s32 %s1042, 64
            %p1048 = scmp.gt.s32.totalorder %s1044, %s1047
          $region144: #{custom-call.3} parent=140 // loop_header_branch
            %1050 = sbr.rel (%p1048) target = $region148
          $region145: #{custom-call.3} parent=140 // loop_body
            %1051 = vst [vmem:[%s1045] sm:$0xff] %v1046
            %v1052 = vld [vmem:[%s1044 + $0x8] sm:$0xff]
            %1053 = vst [vmem:[%s1045 + $0x8] sm:$0xff] %v1052
            %v1054 = vld [vmem:[%s1044 + $0x10] sm:$0xff]
            %1055 = vst [vmem:[%s1045 + $0x10] sm:$0xff] %v1054
            %v1056 = vld [vmem:[%s1044 + $0x18] sm:$0xff]
            %1057 = vst [vmem:[%s1045 + $0x18] sm:$0xff] %v1056
            %v1058 = vld [vmem:[%s1044 + $0x20] sm:$0xff]
            %1059 = vst [vmem:[%s1045 + $0x20] sm:$0xff] %v1058
            %v1060 = vld [vmem:[%s1044 + $0x28] sm:$0xff]
            %1061 = vst [vmem:[%s1045 + $0x28] sm:$0xff] %v1060
            %v1062 = vld [vmem:[%s1044 + $0x30] sm:$0xff]
            %1063 = vst [vmem:[%s1045 + $0x30] sm:$0xff] %v1062
            %v1064 = vld [vmem:[%s1044 + $0x38] sm:$0xff]
            %1065 = vst [vmem:[%s1045 + $0x38] sm:$0xff] %v1064
          $region146: #{custom-call.3} parent=140 // loop_footer
            %s1066 = scalar_lea.vmem %s1044, 64
            %s1067 = scalar_lea.vmem %s1045, 64
            %v1068 = vld [vmem:[%s1044 + $0x40] sm:$0xff]
          $region147: #{custom-call.3} parent=140 // loop_footer_branch
            %1069 = sbr.rel target = $region143
          $region148: #{custom-call.3} parent=140 // loop_exit
            _
          // While loop
          $region149: #{custom-call.3} parent=140 // loop_pre_header
            _
          $region150: #{custom-call.3} parent=140 // loop_header
            %s1070 = sphi %s1044, %s1078
            %s1071 = sphi %s1045, %s1079
            %v1072 = vphi %v1046, %v1072
            %p1073 = scmp.gt.s32.totalorder %s1070, %s1042
          $region151: #{custom-call.3} parent=140 // loop_header_branch
            %1075 = sbr.rel (%p1073) target = $region155
          $region152: #{custom-call.3} parent=140 // loop_body
            %v1076 = vld [vmem:[%s1070] sm:$0xff]
            %1077 = vst [vmem:[%s1071] sm:$0xff] %v1076
          $region153: #{custom-call.3} parent=140 // loop_footer
            %s1078 = scalar_lea.vmem %s1070, 8
            %s1079 = scalar_lea.vmem %s1071, 8
          $region154: #{custom-call.3} parent=140 // loop_footer_branch
            %1080 = sbr.rel target = $region150
          $region155: #{custom-call.3} parent=140 // loop_exit
            _
        $region141: #{custom-call.3} parent=136 // pred_fallthru
          _
        %s1081 = sand.u32 1, 7
        %s1082 = sshll.u32 1, %s1081
        %s1083 = ssub.s32 %s1082, 1
        %s1084 = smul.u32 %s1034, 128
        %s1085 = sshra.s32 %s1084, 4
        %s1086 = scalar_lea.vmem %s5, %s1085
        %s1087 = smul.u32 %s1034, 128
        %s1088 = sshra.s32 %s1087, 4
        %s1089 = scalar_lea.vmem [#allocation11], %s1088
        %v1090 = vld [vmem:[%s1089] sm:%s1083]
        %1091 = vst [vmem:[%s1086] sm:%s1083] %v1090
      $region137: #{custom-call.3} parent=132 // pred_fallthru
        _
    $region133: #{custom-call.3} parent=1 // pred_fallthru
      _
    %s1093 = ssub.s32 64, 64
    %1094 = vsyncadd [#allocation14], %s1093
    %s1095 = sshll.u32 [#allocation13], 4
    %s1096 = int_to_ptr.vmem [resolvable:$true] %s1095
    %1098 = dma.vmem_to_hbm [thread:$0]  %s1096, 64, %s6, [#allocation14]
    %s1100 = ssub.s32 64, 64
    %1101 = vsyncadd [#allocation17], %s1100
    %s1102 = sshll.u32 [#allocation16], 4
    %s1103 = int_to_ptr.vmem [resolvable:$true] %s1102
    %1105 = dma.vmem_to_hbm [thread:$0]  %s1103, 64, %s7, [#allocation17]
    %s1107 = ssub.s32 64, 64
    %1108 = vsyncadd [#allocation17], %s1107
    %s1109 = sshll.u32 [#allocation19], 4
    %s1110 = int_to_ptr.vmem [resolvable:$true] %s1109
    %1112 = dma.vmem_to_hbm [thread:$0]  %s1110, 64, %s8, [#allocation17]
    %s1114 = ssub.s32 64, 64
    %1115 = vsyncadd [#allocation22], %s1114
    %s1116 = sshll.u32 [#allocation21], 4
    %s1117 = int_to_ptr.vmem [resolvable:$true] %s1116
    %1119 = dma.vmem_to_hbm [thread:$0]  %s1117, 64, %s9, [#allocation22]
    // Predicated region
    $region156: #{custom-call.3} parent=1 // pred_check
      _
    $region157: #{custom-call.3} parent=1 // pred_check_branch
      %1121 = sbr.rel (0) target = $region159
    $region158: #{custom-call.3} parent=1 // pred_region
      _
    $region159: #{custom-call.3} parent=1 // pred_fallthru
      _
    // Predicated region
    $region160: #{custom-call.3} parent=1 // pred_check
      _
    $region161: #{custom-call.3} parent=1 // pred_check_branch
      %1123 = sbr.rel (0) target = $region163
    $region162: #{custom-call.3} parent=1 // pred_region
      _
    $region163: #{custom-call.3} parent=1 // pred_fallthru
      _
    %1124 = dma.done [#allocation14], 64
    %1125 = dma.done [#allocation17], 64
    %1126 = dma.done [#allocation17], 64
    %1127 = dma.done [#allocation22], 64
    %1128 = vsyncpa [#allocation14], 1
    %1129 = vsyncpa [#allocation17], 1
    %1130 = vsyncpa [#allocation22], 1

// kernel: _probe_stats.1
$region0: #{_probe_stats.1}
  #allocation0 [shape = 'u32[]', space=smem, size = 0x4, offset = 0x4, fixed_abs, tag = 'smem constant byte address 0x4 - core index']
  #allocation1 [shape = 'u32[144,128]{1,0:T(1,128)}', space=vmem, size = 0x12000, scoped, tag = 'internal scratch']
  %s0 = inlined_call_operand.vmem [shape: f32[8,32], index: 0, kind: input, shape index: {}]
  %s1 = inlined_call_operand.vmem [shape: f32[1,8,8], index: 1, kind: output, shape index: {}]
  %s2 = sld [smem:[#allocation0]]
  $region18: #{_probe_stats.1} parent=0
    _
  %s4 = ssub.s32 1, %s2
  %s5 = scalar_select 0, %s4, %s2
  // Predicated region
  $region2: #{_probe_stats.1} parent=0 // pred_check
    _
  $region3: #{_probe_stats.1} parent=0 // pred_check_branch
    %7 = sbr.rel (0) target = $region5
  $region4: #{_probe_stats.1} parent=0 // pred_region
    %s8 = sadd.s32 0, 0
    %p9 = scmp.lt.s32.totalorder %s8, 0
    %s10 = scalar_select %p9, %s8, 0
    %s11 = smul.addr %s10, 8
    %s12 = scalar_lea.vmem %s0, %s11
    %s13 = sadd.s32 0, 0
  $region5: #{_probe_stats.1} parent=0 // pred_fallthru
    _
  %s14 = sadd.s32 0, 0
  %p15 = scmp.lt.s32.totalorder %s14, 0
  %s16 = scalar_select %p15, %s14, 0
  %s17 = smul.addr %s16, 8
  %s18 = scalar_lea.vmem %s0, %s17
  %s19 = sadd.s32 0, 0
  %p20 = scmp.lt.s32.totalorder %s19, 0
  %s21 = scalar_select %p20, %s19, 0
  %s22 = smul.addr %s21, 8
  %s23 = scalar_lea.vmem %s0, %s22
  %s24 = sadd.s32 0, 0
  %p25 = scmp.eq.s32.totalorder 0, 0
  // Predicated region
  $region6: #{_probe_stats.1} parent=0 // pred_check
    %p26 = pneg %p25
  $region7: #{_probe_stats.1} parent=0 // pred_check_branch
    %28 = sbr.rel (%p26) target = $region9
  $region8: #{_probe_stats.1} parent=0 // pred_region
    %vm29 = vcmask 64512
    %30 = vst.msk [vmem:[%s1] sm:$0xff] %vm29, 0.0
  $region9: #{_probe_stats.1} parent=0 // pred_fallthru
    _
  %v31 = vld [vmem:[%s23] sm:$0xff]
  %vm32 = vcmask 261120
  %v34 = vsel %vm32, %v31, 0
  %36 = vmatprep.subr.mxu0 0.0
  %37 = vmatpush1.xpose.msra.mxu0 0.0
  %38 = vmatprep.subr.mxu0 0.0
  %39 = vmatpush1.xpose.msra.mxu0 0.0
  %40 = vmatprep.subr.mxu0 0.0
  %41 = vmatpush1.xpose.msra.mxu0 0.0
  %42 = vmatprep.subr.mxu0 0.0
  %43 = vmatpush1.xpose.msra.mxu0 0.0
  %44 = vmatprep.subr.mxu0 0.0
  %45 = vmatpush1.xpose.msra.mxu0 0.0
  %46 = vmatprep.subr.mxu0 0.0
  %47 = vmatpush1.xpose.msra.mxu0 0.0
  %48 = vmatprep.subr.mxu0 0.0
  %49 = vmatpush1.xpose.msra.mxu0 0.0
  %50 = vmatprep.subr.mxu0 0.0
  %51 = vmatpush1.xpose.msra.mxu0 0.0
  %52 = vmatprep.subr.mxu0 0.0
  %53 = vmatpush1.xpose.msra.mxu0 0.0
  %54 = vmatprep.subr.mxu0 0.0
  %55 = vmatpush1.xpose.msra.mxu0 0.0
  %56 = vmatprep.subr.mxu0 0.0
  %57 = vmatpush1.xpose.msra.mxu0 0.0
  %58 = vmatprep.subr.mxu0 0.0
  %59 = vmatpush1.xpose.msra.mxu0 0.0
  %60 = vmatprep.subr.mxu0 0.0
  %61 = vmatpush1.xpose.msra.mxu0 0.0
  %62 = vmatprep.subr.mxu0 0.0
  %63 = vmatpush1.xpose.msra.mxu0 0.0
  %64 = vmatprep.subr.mxu0 0.0
  %65 = vmatpush1.xpose.msra.mxu0 0.0
  %66 = vmatprep.subr.mxu0 0.0
  %67 = vmatpush1.xpose.msra.mxu0 %v34
  %68 = vmatprep.subr.mxu0 0.0
  %69 = vmatpush2.xpose.msra.mxu0 0.0
  %70 = vmatprep.subr.mxu0 0.0
  %71 = vmatpush2.xpose.msra.mxu0 0.0
  %72 = vmatprep.subr.mxu0 0.0
  %73 = vmatpush2.xpose.msra.mxu0 0.0
  %74 = vmatprep.subr.mxu0 0.0
  %75 = vmatpush2.xpose.msra.mxu0 0.0
  %76 = vmatprep.subr.mxu0 0.0
  %77 = vmatpush2.xpose.msra.mxu0 0.0
  %78 = vmatprep.subr.mxu0 0.0
  %79 = vmatpush2.xpose.msra.mxu0 0.0
  %80 = vmatprep.subr.mxu0 0.0
  %81 = vmatpush2.xpose.msra.mxu0 0.0
  %82 = vmatprep.subr.mxu0 0.0
  %83 = vmatpush2.xpose.msra.mxu0 0.0
  %84 = vmatprep.subr.mxu0 0.0
  %85 = vmatpush2.xpose.msra.mxu0 0.0
  %86 = vmatprep.subr.mxu0 0.0
  %87 = vmatpush2.xpose.msra.mxu0 0.0
  %88 = vmatprep.subr.mxu0 0.0
  %89 = vmatpush2.xpose.msra.mxu0 0.0
  %90 = vmatprep.subr.mxu0 0.0
  %91 = vmatpush2.xpose.msra.mxu0 0.0
  %92 = vmatprep.subr.mxu0 0.0
  %93 = vmatpush2.xpose.msra.mxu0 0.0
  %94 = vmatprep.subr.mxu0 0.0
  %95 = vmatpush2.xpose.msra.mxu0 0.0
  %96 = vmatprep.subr.mxu0 0.0
  %97 = vmatpush2.xpose.msra.mxu0 0.0
  %98 = vmatprep.subr.mxu0 0.0
  %99 = vmatpush2.xpose.msra.mxu0 0.0
  %100 = vmatprep.mubr.f32.mxu0 0.0
  %101 = vmatmul.mubr.f32.gmra.mxu0 %v34
  %v102 = vpop.f32.mrf.mxu0
  %v103 = vadd.f32 0.0, %v102
  %v104 = vpop.f32.mrf.mxu0
  %105 = vdwg.mxu0
  %v106 = vld [vmem:[%s1] sm:$0xff]
  %v107 = vadd.f32 %v106, %v103
  %vm108 = vcmask 64512
  %109 = vst.msk [vmem:[%s1] sm:$0xff] %vm108, %v107
  // Predicated region
  $region10: #{_probe_stats.1} parent=0 // pred_check
    _
  $region11: #{_probe_stats.1} parent=0 // pred_check_branch
    %111 = sbr.rel (0) target = $region13
  $region12: #{_probe_stats.1} parent=0 // pred_region
    _
  $region13: #{_probe_stats.1} parent=0 // pred_fallthru
    _
  // Predicated region
  $region14: #{_probe_stats.1} parent=0 // pred_check
    _
  $region15: #{_probe_stats.1} parent=0 // pred_check_branch
    %113 = sbr.rel (0) target = $region17
  $region16: #{_probe_stats.1} parent=0 // pred_region
    _
  $region17: #{_probe_stats.1} parent=0 // pred_fallthru
    _

</llo_original>
